<compile_context>
chip_gen: v7x
topology: tpu7x:2x2x1
jax: 0.10.0
libtpu: 0.0.40
codegen_flags: <defaults>
</compile_context>

<pallas_src>
import functools

import jax
import jax.numpy as jnp
from jax.experimental import pallas as pl
from jax.experimental.pallas import tpu as pltpu

_LANE = 128                    # vreg lane width
_SUBLANE = 8                   # vreg sublane count
_TB_MAX = 1024                 # max batch rows per grid step (mem-bound -> big tiles)
_VMEM_TILE_BUDGET = 24 << 20   # target VMEM working-set bytes (fits every TPU gen)
_MIB = 1 << 20


def _round_up(n, m):
    return ((n + m - 1) // m) * m


def _sldd_kernel(x_ref, wt_ref, b_ref, o_ref):
    # Normalization already folded into wt / b: one MXU dot + one VPU bias add.
    acc = jnp.dot(x_ref[...], wt_ref[...], preferred_element_type=jnp.float32)
    o_ref[...] = (acc + b_ref[...]).astype(o_ref.dtype)


def sldd_prepare_params(mean, std, weight, bias=None, compute_dtype=None):
    """One-time prep (hoisted out of the per-forward path).

    Returns (wt, b2, num_classes):
      wt: (F, C_pad) folded, transposed, lane-padded weight in `compute_dtype`
      b2: (1, C_pad) folded bias in f32
    """
    C, F = weight.shape
    if bias is None:
        bias = jnp.zeros((C,), dtype=jnp.float32)
    if compute_dtype is None:
        compute_dtype = weight.dtype

    inv_std = 1.0 / jnp.maximum(std.astype(jnp.float32), 1e-6)        # (F,)
    w_f32 = weight.astype(jnp.float32) * inv_std[None, :]             # (C, F)
    # Cast first, then fold the bias with the *cast* weight so the folded
    # algebra matches the in-kernel matmul operand exactly.
    w_cast = w_f32.astype(compute_dtype)                              # (C, F)
    b_fold = bias.astype(jnp.float32) - (
        w_cast.astype(jnp.float32) @ mean.astype(jnp.float32))        # (C,)

    C_pad = _round_up(C, _LANE)   # lane-dense output columns -> unmasked vst
    wt = jnp.zeros((F, C_pad), dtype=compute_dtype).at[:, :C].set(w_cast.T)
    b2 = jnp.zeros((1, C_pad), dtype=jnp.float32).at[:, :C].set(b_fold[None, :])
    return wt, b2, C


def _batch_tile(B, F, C_pad, in_bytes, out_bytes):
    """Balanced batch tiles, >=2 parallel steps for 2-TC chips when B allows,
    bounded VMEM working set."""
    def vmem_need(tb):
        x_t = tb * F * in_bytes
        o_t = tb * C_pad * out_bytes
        w_r = F * C_pad * in_bytes + C_pad * 4
        # double-buffered x/out tiles + (double-buffered) resident weight/bias
        return 2 * (x_t + o_t) + 2 * w_r

    tb_max = _TB_MAX
    if B >= 2 * _SUBLANE:   # keep at least 2 grid steps for megacore sharding
        tb_max = min(tb_max, _round_up(pl.cdiv(B, 2), _SUBLANE))
    num_tiles = pl.cdiv(B, tb_max)
    tb = _round_up(pl.cdiv(B, num_tiles), _SUBLANE)
    while tb > _SUBLANE and vmem_need(tb) > _VMEM_TILE_BUDGET:
        num_tiles += 1
        tb = _round_up(pl.cdiv(B, num_tiles), _SUBLANE)
    return tb, vmem_need(tb)


@functools.partial(jax.jit, static_argnames=("num_classes",))
def sldd_level_forward_prepared(x, wt, b2, num_classes):
    """x: (B, F); wt: (F, C_pad) prepped weight; b2: (1, C_pad) prepped bias."""
    B, F = x.shape
    Fw, C_pad = wt.shape
    assert F == Fw, "feature dim mismatch between x and prepared weight"
    out_dtype = x.dtype
    x_in = x.astype(wt.dtype)

    TB, need = _batch_tile(B, F, C_pad, x_in.dtype.itemsize,
                           jnp.dtype(out_dtype).itemsize)
    vmem_limit = int(min(max(32 * _MIB, _round_up(need, _MIB) + 8 * _MIB),
                         48 * _MIB))
    # TODO(synk): if F * C_pad alone exceeds the VMEM budget (very large heads),
    # add a K-tiled grid axis with an f32 accumulator scratch instead of keeping
    # the whole weight VMEM-resident.

    out = pl.pallas_call(
        _sldd_kernel,
        out_shape=jax.ShapeDtypeStruct((B, C_pad), out_dtype),
        grid=(pl.cdiv(B, TB),),                             # ragged last tile, no x pad copy
        in_specs=[
            pl.BlockSpec((TB, F), lambda i: (i, 0)),        # x streamed over batch
            pl.BlockSpec((F, C_pad), lambda i: (0, 0)),     # weight VMEM-resident
            pl.BlockSpec((1, C_pad), lambda i: (0, 0)),     # bias VMEM-resident
        ],
        out_specs=pl.BlockSpec((TB, C_pad), lambda i: (i, 0)),
        compiler_params=pltpu.CompilerParams(
            dimension_semantics=("parallel",),
            vmem_limit_bytes=vmem_limit),
    )(x_in, wt, b2)

    if C_pad != num_classes:
        out = out[:, :num_classes]      # skipped entirely when C % 128 == 0
    return out


def sldd_level_forward(x, mean, std, weight, bias=None):
    """Convenience one-shot path (pays prep per call). Prefer prepare-once +
    sldd_level_forward_prepared for repeated inference."""
    wt, b2, num_classes = sldd_prepare_params(mean, std, weight, bias,
                                              compute_dtype=x.dtype)
    return sldd_level_forward_prepared(x, wt, b2, num_classes=num_classes)


def sldd_level_reference(x, mean, std, weight, bias):
    x_norm = (x - mean) / jnp.maximum(std, 1e-6)
    return x_norm @ weight.T + (0.0 if bias is None else bias)


if __name__ == "__main__":
    key = jax.random.PRNGKey(0)
    k_sel, k_w, k_mean, k_std, k_bias, k_x, k_x2 = jax.random.split(key, 7)

    # Synthetic module configuration (deterministic init, no checkpoint load).
    full_features = 64      # size of the full (unselected) feature space
    n_features = 32         # len(selection) == selected feature count
    num_classes = 16
    batch = 8

    selection = jax.random.permutation(k_sel, full_features)[:n_features]
    weight_at_selection = (jax.random.normal(k_w, (num_classes, n_features),
                                             dtype=jnp.float32) * 0.1)
    full_mean = jax.random.normal(k_mean, (full_features,), dtype=jnp.float32)
    full_std = jax.random.uniform(k_std, (full_features,), dtype=jnp.float32,
                                  minval=0.0, maxval=2.0)
    bias = jax.random.normal(k_bias, (num_classes,), dtype=jnp.float32) * 0.01

    # __init__ glue (plain JAX): gather mean/std at `selection` when they come
    # from the full feature space (len(mean) != len(selection) branch).
    sel_mean = full_mean[selection]
    sel_std = full_std[selection]

    # Forward input lives in selected-feature space: (B, n_features)
    x = jax.random.normal(k_x, (batch, n_features), dtype=jnp.float32)

    # One-time prep (fold + transpose + pad), hoisted out of the forward path.
    wt, b2, C = sldd_prepare_params(sel_mean, sel_std, weight_at_selection, bias)

    # With bias.
    out = jax.block_until_ready(sldd_level_forward_prepared(x, wt, b2, num_classes=C))
    ref = sldd_level_reference(x, sel_mean, sel_std, weight_at_selection, bias)
    assert out.shape == (batch, num_classes)
    assert jnp.allclose(out, ref, atol=1e-4, rtol=1e-4), "mismatch vs reference (bias)"

    # Without bias (zeros fallback), via the convenience one-shot wrapper.
    out_nb = jax.block_until_ready(
        sldd_level_forward(x, sel_mean, sel_std, weight_at_selection, None))
    ref_nb = sldd_level_reference(x, sel_mean, sel_std, weight_at_selection, None)
    assert jnp.allclose(out_nb, ref_nb, atol=1e-4, rtol=1e-4), "mismatch (no bias)"

    # Ragged batch (B not a multiple of the tile) exercising the boundary block
    # and the multi-step parallel grid.
    x_rag = jax.random.normal(k_x2, (20, n_features), dtype=jnp.float32)
    out_rag = jax.block_until_ready(
        sldd_level_forward_prepared(x_rag, wt, b2, num_classes=C))
    ref_rag = sldd_level_reference(x_rag, sel_mean, sel_std, weight_at_selection, bias)
    assert out_rag.shape == (20, num_classes)
    assert jnp.allclose(out_rag, ref_rag, atol=1e-4, rtol=1e-4), "mismatch (ragged)"

    print("KERNEL_OK")
</pallas_src>

<mosaic_0001>
module attributes {stable_mosaic.version = 11 : i64} {
  func.func @_sldd_kernel(%arg0: i32, %arg1: memref<8x32xf32, #tpu.memory_space<vmem>>, %arg2: memref<32x128xf32, #tpu.memory_space<vmem>>, %arg3: memref<1x128xf32, #tpu.memory_space<vmem>>, %arg4: memref<8x128xf32, #tpu.memory_space<vmem>>) attributes {dimension_semantics = [#tpu.dimension_semantics<parallel>], iteration_bounds = array<i64: 1>, scalar_prefetch = 0 : i64, scratch_operands = 0 : i64, tpu.core_type = #tpu.core_type<tc>, window_params = [{transform_indices = @transform_0, window_bounds = array<i64: 8, 32>}, {pipeline_mode = #tpu.pipeline_mode<synchronous>, transform_indices = @transform_1, window_bounds = array<i64: 32, 128>}, {pipeline_mode = #tpu.pipeline_mode<synchronous>, transform_indices = @transform_2, window_bounds = array<i64: 1, 128>}, {transform_indices = @transform_3, window_bounds = array<i64: 8, 128>}]} {
    %c0 = arith.constant 0 : index
    %c0_0 = arith.constant 0 : index
    %0 = vector.load %arg1[%c0, %c0_0] : memref<8x32xf32, #tpu.memory_space<vmem>>, vector<8x32xf32>
    %c0_1 = arith.constant 0 : index
    %c0_2 = arith.constant 0 : index
    %1 = vector.load %arg2[%c0_1, %c0_2] : memref<32x128xf32, #tpu.memory_space<vmem>>, vector<32x128xf32>
    %cst = arith.constant dense<0.000000e+00> : vector<8x128xf32>
    %2 = tpu.matmul %0, %1, %cst {dimension_numbers = #tpu.dot_dimension_numbers<[1], [0], [0], [1], [0, 0, 1, 1], [], []>} : vector<8x32xf32>, vector<32x128xf32>, vector<8x128xf32> -> vector<8x128xf32>
    %c0_3 = arith.constant 0 : index
    %c0_4 = arith.constant 0 : index
    %3 = vector.load %arg3[%c0_3, %c0_4] : memref<1x128xf32, #tpu.memory_space<vmem>>, vector<1x128xf32>
    %4 = vector.broadcast %3 : vector<1x128xf32> to vector<8x128xf32>
    %5 = arith.addf %2, %4 : vector<8x128xf32>
    %c0_5 = arith.constant 0 : index
    %c0_6 = arith.constant 0 : index
    %6 = vector.load %arg4[%c0_5, %c0_6] : memref<8x128xf32, #tpu.memory_space<vmem>>, vector<8x128xf32>
    tpu.vector_store %arg4[%c0_5, %c0_6], %5 {strides = array<i32>} : memref<8x128xf32, #tpu.memory_space<vmem>>, vector<8x128xf32>,
    return
  }
  func.func @transform_0(%arg0: i32) -> (i32, i32) {
    %c0_i32 = arith.constant 0 : i32
    %c0_i32_0 = arith.constant 0 : i32
    return %arg0, %c0_i32 : i32, i32
  }
  func.func @transform_1(%arg0: i32) -> (i32, i32) {
    %c0_i32 = arith.constant 0 : i32
    %c0_i32_0 = arith.constant 0 : i32
    %c0_i32_1 = arith.constant 0 : i32
    return %c0_i32, %c0_i32_0 : i32, i32
  }
  func.func @transform_2(%arg0: i32) -> (i32, i32) {
    %c0_i32 = arith.constant 0 : i32
    %c0_i32_0 = arith.constant 0 : i32
    %c0_i32_1 = arith.constant 0 : i32
    return %c0_i32, %c0_i32_0 : i32, i32
  }
  func.func @transform_3(%arg0: i32) -> (i32, i32) {
    %c0_i32 = arith.constant 0 : i32
    %c0_i32_0 = arith.constant 0 : i32
    return %arg0, %c0_i32 : i32, i32
  }
}

</mosaic_0001>

<llo_original>
// kernel: sldd_level_forward_prepared.1
$region0: #{sldd_level_forward_prepared.1}
  #allocation0 [shape = 'u32[]', space=smem, size = 0x4, offset = 0x4, fixed_abs, tag = 'smem constant byte address 0x4 - core index']
  #allocation1 [shape = 'u32[144,128]{1,0:T(1,128)}', space=vmem, size = 0x12000, scoped, tag = 'internal scratch']
  %s0 = inlined_call_operand.hbm [shape: f32[8,32], index: 0, kind: input, shape index: {}]
  %s1 = inlined_call_operand.hbm [shape: f32[32,128], index: 1, kind: input, shape index: {}]
  %s2 = inlined_call_operand.vmem [shape: f32[1,128], index: 2, kind: input, shape index: {}]
  %s3 = inlined_call_operand.hbm [shape: f32[8,128], index: 3, kind: output, shape index: {}]
  %s4 = sld [smem:[#allocation0]]
  $region30: #{sldd_level_forward_prepared.1} parent=0
    _
  %s6 = ssub.s32 1, %s4
  %s7 = scalar_select 0, %s6, %s4
  $region1: #{sldd_level_forward_prepared.1} parent=0
    #allocation2 [shape = 'u8[4096]{0}', space=vmem, size = 0x1000, scoped, tag = 'input window, operand 0, single buffered']
    #allocation3 [shape = 's32[1]{0}', space=sflag, size = 0x4, scoped, tag = 'scoped memory for sldd_level_forward_prepared.1']
    #allocation4 [shape = 's32[1]{0}', space=sflag, size = 0x4, scoped, tag = 'scoped memory for sldd_level_forward_prepared.1']
    #allocation5 [shape = 'u8[16384]{0}', space=vmem, size = 0x4000, scoped, tag = 'input window, operand 1, single buffered']
    #allocation6 [shape = 's32[1]{0}', space=sflag, size = 0x4, scoped, tag = 'scoped memory for sldd_level_forward_prepared.1']
    #allocation7 [shape = 'u8[4096]{0}', space=vmem, size = 0x1000, scoped, tag = 'output window, operand 0, single buffered']
    %8 = vsyncpa [#allocation3], 0
    %9 = vsyncpa [#allocation6], 0
    %10 = vsyncpa [#allocation4], 0
    // Predicated region
    $region2: #{sldd_level_forward_prepared.1} parent=1 // pred_check
      _
    $region3: #{sldd_level_forward_prepared.1} parent=1 // pred_check_branch
      %12 = sbr.rel (0) target = $region5
    $region4: #{sldd_level_forward_prepared.1} parent=1 // pred_region
      %s14 = ssub.s32 128, 128
      %15 = vsyncadd [#allocation3], %s14
      %s17 = sshll.u32 [#allocation2], 4
      %s18 = int_to_ptr.vmem [resolvable:$true] %s17
      %20 = dma.hbm_to_vmem [thread:$0]  %s0, 128, %s18, [#allocation3]
    $region5: #{sldd_level_forward_prepared.1} parent=1 // pred_fallthru
      _
    // Predicated region
    $region6: #{sldd_level_forward_prepared.1} parent=1 // pred_check
      _
    $region7: #{sldd_level_forward_prepared.1} parent=1 // pred_check_branch
      %22 = sbr.rel (0) target = $region9
    $region8: #{sldd_level_forward_prepared.1} parent=1 // pred_region
      %s24 = ssub.s32 512, 512
      %25 = vsyncadd [#allocation6], %s24
      %s26 = sshll.u32 [#allocation5], 4
      %s27 = int_to_ptr.vmem [resolvable:$true] %s26
      %32 = dma.hbm_to_vmem [thread:$0]  %s1, 512, %s27, [#allocation6], 128, 128, 8
    $region9: #{sldd_level_forward_prepared.1} parent=1 // pred_fallthru
      _
    // Predicated region
    $region10: #{sldd_level_forward_prepared.1} parent=1 // pred_check
      _
    $region11: #{sldd_level_forward_prepared.1} parent=1 // pred_check_branch
      %34 = sbr.rel (0) target = $region13
    $region12: #{sldd_level_forward_prepared.1} parent=1 // pred_region
      _
    $region13: #{sldd_level_forward_prepared.1} parent=1 // pred_fallthru
      _
    // Predicated region
    $region14: #{sldd_level_forward_prepared.1} parent=1 // pred_check
      _
    $region15: #{sldd_level_forward_prepared.1} parent=1 // pred_check_branch
      %36 = sbr.rel (0) target = $region17
    $region16: #{sldd_level_forward_prepared.1} parent=1 // pred_region
      %37 = dma.done [#allocation3], 128
    $region17: #{sldd_level_forward_prepared.1} parent=1 // pred_fallthru
      _
    // Predicated region
    $region18: #{sldd_level_forward_prepared.1} parent=1 // pred_check
      _
    $region19: #{sldd_level_forward_prepared.1} parent=1 // pred_check_branch
      %39 = sbr.rel (0) target = $region21
    $region20: #{sldd_level_forward_prepared.1} parent=1 // pred_region
      %40 = dma.done [#allocation6], 512
    $region21: #{sldd_level_forward_prepared.1} parent=1 // pred_fallthru
      _
    %v41 = vld [vmem:[#allocation2] sm:$0xff]
    %v42 = vld [vmem:[#allocation5] sm:$0xff]
    %v43 = vld [vmem:[#allocation5 + $0x8] sm:$0xff]
    %v44 = vld [vmem:[#allocation5 + $0x10] sm:$0xff]
    %v45 = vld [vmem:[#allocation5 + $0x18] sm:$0xff]
    %v46 = vld [vmem:[%s2] sm:$0x1]
    %v48 = vlaneseq
    %v49 = vshrl.u32 %v48, 7
    %v50 = vsub.s32 0, %v49
    %v51 = vrot.slane %v46, %v50
    %vm53 = vcmask 261120
    %v55 = vsel %vm53, %v41, 0
    %57 = vmatprep.subr.mxu0 0.0
    %58 = vmatpush1.msra.mxu0 %v42
    %59 = vmatprep.subr.mxu0 0.0
    %60 = vmatpush1.msra.mxu0 %v43
    %61 = vmatprep.subr.mxu0 0.0
    %62 = vmatpush1.msra.mxu0 %v44
    %63 = vmatprep.subr.mxu0 0.0
    %64 = vmatpush1.msra.mxu0 %v45
    %65 = vmatprep.subr.mxu0 0.0
    %66 = vmatpush1.msra.mxu0 0.0
    %67 = vmatprep.subr.mxu0 0.0
    %68 = vmatpush1.msra.mxu0 0.0
    %69 = vmatprep.subr.mxu0 0.0
    %70 = vmatpush1.msra.mxu0 0.0
    %71 = vmatprep.subr.mxu0 0.0
    %72 = vmatpush1.msra.mxu0 0.0
    %73 = vmatprep.subr.mxu0 0.0
    %74 = vmatpush1.msra.mxu0 0.0
    %75 = vmatprep.subr.mxu0 0.0
    %76 = vmatpush1.msra.mxu0 0.0
    %77 = vmatprep.subr.mxu0 0.0
    %78 = vmatpush1.msra.mxu0 0.0
    %79 = vmatprep.subr.mxu0 0.0
    %80 = vmatpush1.msra.mxu0 0.0
    %81 = vmatprep.subr.mxu0 0.0
    %82 = vmatpush1.msra.mxu0 0.0
    %83 = vmatprep.subr.mxu0 0.0
    %84 = vmatpush1.msra.mxu0 0.0
    %85 = vmatprep.subr.mxu0 0.0
    %86 = vmatpush1.msra.mxu0 0.0
    %87 = vmatprep.subr.mxu0 0.0
    %88 = vmatpush1.msra.mxu0 0.0
    %89 = vmatprep.subr.mxu0 0.0
    %90 = vmatpush1.msra.mxu0 0.0
    %91 = vmatprep.subr.mxu0 0.0
    %92 = vmatpush1.msra.mxu0 0.0
    %93 = vmatprep.subr.mxu0 0.0
    %94 = vmatpush1.msra.mxu0 0.0
    %95 = vmatprep.subr.mxu0 0.0
    %96 = vmatpush1.msra.mxu0 0.0
    %97 = vmatprep.subr.mxu0 0.0
    %98 = vmatpush1.msra.mxu0 0.0
    %99 = vmatprep.subr.mxu0 0.0
    %100 = vmatpush1.msra.mxu0 0.0
    %101 = vmatprep.subr.mxu0 0.0
    %102 = vmatpush1.msra.mxu0 0.0
    %103 = vmatprep.subr.mxu0 0.0
    %104 = vmatpush1.msra.mxu0 0.0
    %105 = vmatprep.subr.mxu0 0.0
    %106 = vmatpush1.msra.mxu0 0.0
    %107 = vmatprep.subr.mxu0 0.0
    %108 = vmatpush1.msra.mxu0 0.0
    %109 = vmatprep.subr.mxu0 0.0
    %110 = vmatpush1.msra.mxu0 0.0
    %111 = vmatprep.subr.mxu0 0.0
    %112 = vmatpush1.msra.mxu0 0.0
    %113 = vmatprep.subr.mxu0 0.0
    %114 = vmatpush1.msra.mxu0 0.0
    %115 = vmatprep.subr.mxu0 0.0
    %116 = vmatpush1.msra.mxu0 0.0
    %117 = vmatprep.subr.mxu0 0.0
    %118 = vmatpush1.msra.mxu0 0.0
    %119 = vmatprep.subr.mxu0 0.0
    %120 = vmatpush1.msra.mxu0 0.0
    %121 = vmatprep.mubr.f32.mxu0 0.0
    %122 = vmatmul.mubr.f32.gmra.mrb[0].mxu0 %v55
    %v123 = vpop.f32.mrb[0].mxu0
    %v124 = vadd.f32 %v51, %v123
    %v125 = vpop.f32.mrb[0].mxu0
    %126 = vdwg.mxu0
    %127 = vst [vmem:[#allocation7] sm:$0xff] %v124
    // Predicated region
    $region22: #{sldd_level_forward_prepared.1} parent=1 // pred_check
      _
    $region23: #{sldd_level_forward_prepared.1} parent=1 // pred_check_branch
      %129 = sbr.rel (0) target = $region25
    $region24: #{sldd_level_forward_prepared.1} parent=1 // pred_region
      %s131 = ssub.s32 128, 128
      %132 = vsyncadd [#allocation4], %s131
      %s134 = sshll.u32 [#allocation7], 4
      %s135 = int_to_ptr.vmem [resolvable:$true] %s134
      %137 = dma.vmem_to_hbm [thread:$0]  %s135, 128, %s3, [#allocation4]
    $region25: #{sldd_level_forward_prepared.1} parent=1 // pred_fallthru
      _
    // Predicated region
    $region26: #{sldd_level_forward_prepared.1} parent=1 // pred_check
      _
    $region27: #{sldd_level_forward_prepared.1} parent=1 // pred_check_branch
      %139 = sbr.rel (0) target = $region29
    $region28: #{sldd_level_forward_prepared.1} parent=1 // pred_region
      %140 = dma.done [#allocation4], 128
    $region29: #{sldd_level_forward_prepared.1} parent=1 // pred_fallthru
      _
    %141 = vsyncpa [#allocation3], 1
    %142 = vsyncpa [#allocation6], 1
    %143 = vsyncpa [#allocation4], 1

</llo_original>
